<compile_context>
chip_gen: v7x
topology: tpu7x:2x2x1
jax: 0.10.0
libtpu: 0.0.40
codegen_flags: <defaults>
</compile_context>

<pallas_src>
import functools

import jax
import jax.numpy as jnp
from jax.experimental import pallas as pl
from jax.experimental.pallas import tpu as pltpu


# ---------------------------------------------------------------------------
# Kernels
# ---------------------------------------------------------------------------
def _rmsnorm_kernel(x_ref, g_ref, o_ref, *, eps, inv_h):
    """Standard path: one normalization group per row, reduce over lanes."""
    x = x_ref[...].astype(jnp.float32)                  # (T, H)
    g = g_ref[...].astype(jnp.float32)                  # (1, H)
    ss = jnp.sum(x * x, axis=-1, keepdims=True)         # XLU lane reduction
    inv = jax.lax.rsqrt(ss * inv_h + eps)                # EUP rsqrt
    o_ref[...] = (x * inv * g).astype(o_ref.dtype)


def _rmsnorm_folded_kernel(x_ref, g_ref, seg_ref, o_ref, *, eps, inv_h):
    """Lane-folded path for small H (H | 128): k = 128//H groups per 128-lane row.

    Segment sum-of-squares runs on the otherwise-idle MXU with a 0/1
    block-diagonal matrix.  The MXU multiplies in bf16, so x^2 is split into
    bf16 hi/lo parts and two matmuls are accumulated in f32:
        ss = hi @ seg + lo @ seg      (seg entries 0/1 are exact in bf16)
    which is exact to ~2^-18 relative — well inside the 1e-5 test tolerance —
    while every load/store stays lane-dense (full-width vst, no vst.msk).
    """
    x = x_ref[...].astype(jnp.float32)                  # (T, 128)
    g = g_ref[...].astype(jnp.float32)                  # (1, 128) gamma tiled k times
    seg = seg_ref[...]                                   # (128, 128) bf16 block-diag ones
    xx = x * x
    hi = xx.astype(jnp.bfloat16)
    lo = (xx - hi.astype(jnp.float32)).astype(jnp.bfloat16)
    ss = (jnp.dot(hi, seg, preferred_element_type=jnp.float32)
          + jnp.dot(lo, seg, preferred_element_type=jnp.float32))
    inv = jax.lax.rsqrt(ss * inv_h + eps)
    o_ref[...] = (x * inv * g).astype(o_ref.dtype)


# ---------------------------------------------------------------------------
# Tile sizing (generation-aware, bytes-based)
# ---------------------------------------------------------------------------
def _vmem_capacity_bytes():
    try:
        return int(pltpu.get_tpu_info().vmem_capacity_bytes)
    except Exception:
        return 64 * 1024 * 1024  # conservative (v7x-sized) fallback


def _pick_tile_rows(n_rows, width, itemsize, vmem_cap):
    """Row-tile that keeps each grid step multi-MiB while fitting VMEM.

    Footprint per row: double-buffered input + output blocks (2x each) plus
    ~3 f32 temporaries per element inside the kernel body.
    """
    small_vmem = vmem_cap <= 64 * 1024 * 1024            # v7x: 64 MiB per TC
    budget = (24 if small_vmem else 56) * 1024 * 1024    # blocks + temporaries
    per_row = width * (4 * itemsize + 3 * 4)
    t = max(1, int(budget // per_row))
    if t >= n_rows:
        return n_rows            # single full-extent block (legal at any size)

    sub = max(8, 32 // max(1, itemsize))   # dtype sublane packing: 8 / 16 / 32
    min_steps = 4 if small_vmem else 2     # feed both v7x TensorCores
    if n_rows >= min_steps * sub:
        t = min(t, n_rows // min_steps)
    t = max(sub, (t // sub) * sub)
    return min(t, n_rows)


# ---------------------------------------------------------------------------
# Wrapper
# ---------------------------------------------------------------------------
def rmsnorm(x, gamma, eps=1e-8):
    """gamma * x * rsqrt(mean(x^2 over normalized dims) + eps).

    x: [..., *normalized_shape]; gamma: normalized_shape (any rank). The
    trailing normalized dims are flattened into one axis of size H.
    """
    orig_shape = x.shape
    gflat = gamma.reshape(-1)
    H = gflat.shape[0]
    x2d = x.reshape(-1, H)
    R = x2d.shape[0]
    itemsize = jnp.dtype(x.dtype).itemsize
    inv_h = 1.0 / float(H)

    vmem_cap = _vmem_capacity_bytes()
    small_vmem = vmem_cap <= 64 * 1024 * 1024

    # Lane-fold: pack k = 128 // H groups into one 128-lane row so stores stay
    # full width.  Pad R by at most k-1 zero rows so the fold always applies.
    k = 128 // H if (H < 128 and 128 % H == 0) else 1
    use_fold = k > 1

    if use_fold:
        R_pad = ((R + k - 1) // k) * k
        x_src = x2d if R_pad == R else jnp.pad(x2d, ((0, R_pad - R), (0, 0)))
        width = 128
        rows = R_pad // k
        x_in = x_src.reshape(rows, width)                      # contiguous view
        g_in = jnp.tile(gflat, k).reshape(1, width)
        seg = jnp.kron(jnp.eye(k, dtype=jnp.float32),
                       jnp.ones((H, H), dtype=jnp.float32)).astype(jnp.bfloat16)
    else:
        R_pad = R
        width = H
        rows = R
        x_in = x2d
        g_in = gflat.reshape(1, width)

    tile_rows = _pick_tile_rows(rows, width, itemsize, vmem_cap)
    grid = (pl.cdiv(rows, tile_rows),)

    compiler_params = pltpu.CompilerParams(
        dimension_semantics=("parallel",),
        vmem_limit_bytes=(40 if small_vmem else 96) * 1024 * 1024,
    )

    flops = 4 * rows * width + (2 * 2 * rows * width * width if use_fold else 0)
    cost = pl.CostEstimate(
        flops=int(flops),
        transcendentals=int(rows),
        bytes_accessed=int(2 * rows * width * itemsize + width * 4),
    )

    x_spec = pl.BlockSpec((tile_rows, width), lambda i: (i, 0))
    g_spec = pl.BlockSpec((1, width), lambda i: (0, 0))
    o_spec = pl.BlockSpec((tile_rows, width), lambda i: (i, 0))
    out_shape = jax.ShapeDtypeStruct((rows, width), x.dtype)

    if use_fold:
        seg_spec = pl.BlockSpec((width, width), lambda i: (0, 0))
        out = pl.pallas_call(
            functools.partial(_rmsnorm_folded_kernel, eps=eps, inv_h=inv_h),
            out_shape=out_shape,
            grid=grid,
            in_specs=[x_spec, g_spec, seg_spec],
            out_specs=o_spec,
            compiler_params=compiler_params,
            cost_estimate=cost,
        )(x_in, g_in, seg)
        out = out.reshape(R_pad, H)[:R]
    else:
        out = pl.pallas_call(
            functools.partial(_rmsnorm_kernel, eps=eps, inv_h=inv_h),
            out_shape=out_shape,
            grid=grid,
            in_specs=[x_spec, g_spec],
            out_specs=o_spec,
            compiler_params=compiler_params,
            cost_estimate=cost,
        )(x_in, g_in)

    return out.reshape(orig_shape)


def rmsnorm_ref(x, gamma, eps=1e-8):
    gflat = gamma.reshape(-1).astype(jnp.float32)
    H = gflat.shape[0]
    x2 = x.reshape(-1, H).astype(jnp.float32)
    rms = jax.lax.rsqrt(jnp.mean(x2 * x2, axis=-1, keepdims=True) + eps)
    return ((x2 * rms) * gflat).reshape(x.shape).astype(x.dtype)


if __name__ == "__main__":
    key = jax.random.PRNGKey(0)

    # Shapes implied by the module: [batch, seq, hidden], normalized over hidden.
    B, S, H = 2, 8, 32
    x = jax.random.normal(key, (B, S, H), dtype=jnp.float32)
    gamma = jnp.ones((H,), dtype=jnp.float32)   # nn.Parameter(torch.ones(H)) init

    y = jax.block_until_ready(rmsnorm(x, gamma, eps=1e-8))
    y_ref = rmsnorm_ref(x, gamma, eps=1e-8)
    assert y.shape == x.shape
    assert jnp.allclose(y, y_ref, atol=1e-5, rtol=1e-5)

    # Fold path with padding (R=15 not a multiple of k=4) and non-trivial gamma.
    k1, k2 = jax.random.split(jax.random.PRNGKey(1))
    x2 = jax.random.normal(k1, (3, 5, 32), dtype=jnp.float32)
    g2 = 1.0 + 0.1 * jax.random.normal(k2, (32,), dtype=jnp.float32)
    y2 = jax.block_until_ready(rmsnorm(x2, g2, eps=1e-8))
    assert jnp.allclose(y2, rmsnorm_ref(x2, g2, eps=1e-8), atol=1e-5, rtol=1e-5)

    # Non-folded path (H=128) with a ragged row count.
    x3 = jax.random.normal(k1, (3, 5, 128), dtype=jnp.float32)
    g3 = 1.0 + 0.1 * jax.random.normal(k2, (128,), dtype=jnp.float32)
    y3 = jax.block_until_ready(rmsnorm(x3, g3, eps=1e-8))
    assert jnp.allclose(y3, rmsnorm_ref(x3, g3, eps=1e-8), atol=1e-5, rtol=1e-5)

    print("KERNEL_OK")
</pallas_src>

<mosaic_0001>
module attributes {stable_mosaic.version = 11 : i64} {
  func.func @_rmsnorm_folded_kernel(%arg0: i32, %arg1: memref<4x128xf32, #tpu.memory_space<vmem>>, %arg2: memref<1x128xf32, #tpu.memory_space<vmem>>, %arg3: memref<128x128xbf16, #tpu.memory_space<vmem>>, %arg4: memref<4x128xf32, #tpu.memory_space<vmem>>) attributes {dimension_semantics = [#tpu.dimension_semantics<parallel>], iteration_bounds = array<i64: 1>, scalar_prefetch = 0 : i64, scratch_operands = 0 : i64, tpu.core_type = #tpu.core_type<tc>, window_params = [{transform_indices = @transform_0, window_bounds = array<i64: 4, 128>}, {pipeline_mode = #tpu.pipeline_mode<synchronous>, transform_indices = @transform_1, window_bounds = array<i64: 1, 128>}, {pipeline_mode = #tpu.pipeline_mode<synchronous>, transform_indices = @transform_2, window_bounds = array<i64: 128, 128>}, {transform_indices = @transform_3, window_bounds = array<i64: 4, 128>}]} {
    %c0 = arith.constant 0 : index
    %c0_0 = arith.constant 0 : index
    %0 = vector.load %arg1[%c0, %c0_0] : memref<4x128xf32, #tpu.memory_space<vmem>>, vector<4x128xf32>
    %c0_1 = arith.constant 0 : index
    %c0_2 = arith.constant 0 : index
    %1 = vector.load %arg2[%c0_1, %c0_2] : memref<1x128xf32, #tpu.memory_space<vmem>>, vector<1x128xf32>
    %c0_3 = arith.constant 0 : index
    %c0_4 = arith.constant 0 : index
    %2 = vector.load %arg3[%c0_3, %c0_4] : memref<128x128xbf16, #tpu.memory_space<vmem>>, vector<128x128xbf16>
    %3 = arith.mulf %0, %0 : vector<4x128xf32>
    %4 = arith.truncf %3 : vector<4x128xf32> to vector<4x128xbf16>
    %5 = arith.extf %4 : vector<4x128xbf16> to vector<4x128xf32>
    %6 = arith.subf %3, %5 : vector<4x128xf32>
    %7 = arith.truncf %6 : vector<4x128xf32> to vector<4x128xbf16>
    %cst = arith.constant dense<0.000000e+00> : vector<4x128xf32>
    %8 = tpu.matmul %4, %2, %cst {dimension_numbers = #tpu.dot_dimension_numbers<[1], [0], [0], [1], [0, 0, 1, 1], [], []>} : vector<4x128xbf16>, vector<128x128xbf16>, vector<4x128xf32> -> vector<4x128xf32>
    %cst_5 = arith.constant dense<0.000000e+00> : vector<4x128xf32>
    %9 = tpu.matmul %7, %2, %cst_5 {dimension_numbers = #tpu.dot_dimension_numbers<[1], [0], [0], [1], [0, 0, 1, 1], [], []>} : vector<4x128xbf16>, vector<128x128xbf16>, vector<4x128xf32> -> vector<4x128xf32>
    %10 = arith.addf %8, %9 : vector<4x128xf32>
    %cst_6 = arith.constant 3.125000e-02 : f32
    %11 = vector.broadcast %cst_6 : f32 to vector<4x128xf32>
    %12 = arith.mulf %10, %11 : vector<4x128xf32>
    %cst_7 = arith.constant 9.99999993E-9 : f32
    %13 = vector.broadcast %cst_7 : f32 to vector<4x128xf32>
    %14 = arith.addf %12, %13 : vector<4x128xf32>
    %15 = math.rsqrt %14 : vector<4x128xf32>
    %16 = arith.mulf %0, %15 : vector<4x128xf32>
    %17 = vector.broadcast %1 : vector<1x128xf32> to vector<4x128xf32>
    %18 = arith.mulf %16, %17 : vector<4x128xf32>
    %c0_8 = arith.constant 0 : index
    %c0_9 = arith.constant 0 : index
    %19 = vector.load %arg4[%c0_8, %c0_9] : memref<4x128xf32, #tpu.memory_space<vmem>>, vector<4x128xf32>
    tpu.vector_store %arg4[%c0_8, %c0_9], %18 {strides = array<i32>} : memref<4x128xf32, #tpu.memory_space<vmem>>, vector<4x128xf32>,
    return
  }
  func.func @transform_0(%arg0: i32) -> (i32, i32) {
    %c0_i32 = arith.constant 0 : i32
    %c0_i32_0 = arith.constant 0 : i32
    return %arg0, %c0_i32 : i32, i32
  }
  func.func @transform_1(%arg0: i32) -> (i32, i32) {
    %c0_i32 = arith.constant 0 : i32
    %c0_i32_0 = arith.constant 0 : i32
    %c0_i32_1 = arith.constant 0 : i32
    return %c0_i32, %c0_i32_0 : i32, i32
  }
  func.func @transform_2(%arg0: i32) -> (i32, i32) {
    %c0_i32 = arith.constant 0 : i32
    %c0_i32_0 = arith.constant 0 : i32
    %c0_i32_1 = arith.constant 0 : i32
    return %c0_i32, %c0_i32_0 : i32, i32
  }
  func.func @transform_3(%arg0: i32) -> (i32, i32) {
    %c0_i32 = arith.constant 0 : i32
    %c0_i32_0 = arith.constant 0 : i32
    return %arg0, %c0_i32 : i32, i32
  }
}

</mosaic_0001>

<llo_original>
// kernel: tpu_custom_call.1
$region0: #{tpu_custom_call.1}
  #allocation0 [shape = 'u32[]', space=smem, size = 0x4, offset = 0x4, fixed_abs, tag = 'smem constant byte address 0x4 - core index']
  #allocation1 [shape = 'u32[144,128]{1,0:T(1,128)}', space=vmem, size = 0x12000, scoped, tag = 'internal scratch']
  %s0 = inlined_call_operand.hbm [shape: f32[4,128], index: 0, kind: input, shape index: {}]
  %s1 = inlined_call_operand.vmem [shape: f32[1,128], index: 1, kind: input, shape index: {}]
  %s2 = inlined_call_operand.hbm [shape: bf16[128,128], index: 2, kind: input, shape index: {}]
  %s3 = inlined_call_operand.hbm [shape: f32[4,128], index: 3, kind: output, shape index: {}]
  %s4 = sld [smem:[#allocation0]]
  $region30: #{tpu_custom_call.1} parent=0
    _
  %s6 = ssub.s32 1, %s4
  %s7 = scalar_select 0, %s6, %s4
  $region1: #{tpu_custom_call.1} parent=0
    #allocation2 [shape = 'u8[2048]{0}', space=vmem, size = 0x800, scoped, tag = 'input window, operand 0, single buffered']
    #allocation3 [shape = 's32[1]{0}', space=sflag, size = 0x4, scoped, tag = 'scoped memory for tpu_custom_call.1']
    #allocation4 [shape = 's32[1]{0}', space=sflag, size = 0x4, scoped, tag = 'scoped memory for tpu_custom_call.1']
    #allocation5 [shape = 'u8[32768]{0}', space=vmem, size = 0x8000, scoped, tag = 'input window, operand 2, single buffered']
    #allocation6 [shape = 's32[1]{0}', space=sflag, size = 0x4, scoped, tag = 'scoped memory for tpu_custom_call.1']
    #allocation7 [shape = 'u8[2048]{0}', space=vmem, size = 0x800, scoped, tag = 'output window, operand 0, single buffered']
    %8 = vsyncpa [#allocation3], 0
    %9 = vsyncpa [#allocation6], 0
    %10 = vsyncpa [#allocation4], 0
    // Predicated region
    $region2: #{tpu_custom_call.1} parent=1 // pred_check
      _
    $region3: #{tpu_custom_call.1} parent=1 // pred_check_branch
      %12 = sbr.rel (0) target = $region5
    $region4: #{tpu_custom_call.1} parent=1 // pred_region
      %s14 = ssub.s32 64, 64
      %15 = vsyncadd [#allocation3], %s14
      %s17 = sshll.u32 [#allocation2], 4
      %s18 = int_to_ptr.vmem [resolvable:$true] %s17
      %20 = dma.hbm_to_vmem [thread:$0]  %s0, 64, %s18, [#allocation3]
    $region5: #{tpu_custom_call.1} parent=1 // pred_fallthru
      _
    // Predicated region
    $region6: #{tpu_custom_call.1} parent=1 // pred_check
      _
    $region7: #{tpu_custom_call.1} parent=1 // pred_check_branch
      %22 = sbr.rel (0) target = $region9
    $region8: #{tpu_custom_call.1} parent=1 // pred_region
      _
    $region9: #{tpu_custom_call.1} parent=1 // pred_fallthru
      _
    // Predicated region
    $region10: #{tpu_custom_call.1} parent=1 // pred_check
      _
    $region11: #{tpu_custom_call.1} parent=1 // pred_check_branch
      %24 = sbr.rel (0) target = $region13
    $region12: #{tpu_custom_call.1} parent=1 // pred_region
      %s26 = ssub.s32 1024, 1024
      %27 = vsyncadd [#allocation6], %s26
      %s28 = sshll.u32 [#allocation5], 4
      %s29 = int_to_ptr.vmem [resolvable:$true] %s28
      %34 = dma.hbm_to_vmem [thread:$0]  %s2, 1024, %s29, [#allocation6], 64, 64, 4
    $region13: #{tpu_custom_call.1} parent=1 // pred_fallthru
      _
    // Predicated region
    $region14: #{tpu_custom_call.1} parent=1 // pred_check
      _
    $region15: #{tpu_custom_call.1} parent=1 // pred_check_branch
      %36 = sbr.rel (0) target = $region17
    $region16: #{tpu_custom_call.1} parent=1 // pred_region
      %37 = dma.done [#allocation3], 64
    $region17: #{tpu_custom_call.1} parent=1 // pred_fallthru
      _
    // Predicated region
    $region18: #{tpu_custom_call.1} parent=1 // pred_check
      _
    $region19: #{tpu_custom_call.1} parent=1 // pred_check_branch
      %39 = sbr.rel (0) target = $region21
    $region20: #{tpu_custom_call.1} parent=1 // pred_region
      %40 = dma.done [#allocation6], 1024
    $region21: #{tpu_custom_call.1} parent=1 // pred_fallthru
      _
    %v42 = vld [vmem:[#allocation2] sm:$0xf]
    %v43 = vld [vmem:[%s1] sm:$0x1]
    %v44 = vld [vmem:[#allocation5] sm:$0xf]
    %v45 = vld [vmem:[#allocation5 + $0x4] sm:$0xf]
    %v46 = vld [vmem:[#allocation5 + $0x8] sm:$0xf]
    %v47 = vld [vmem:[#allocation5 + $0xc] sm:$0xf]
    %v48 = vld [vmem:[#allocation5 + $0x10] sm:$0xf]
    %v49 = vld [vmem:[#allocation5 + $0x14] sm:$0xf]
    %v50 = vld [vmem:[#allocation5 + $0x18] sm:$0xf]
    %v51 = vld [vmem:[#allocation5 + $0x1c] sm:$0xf]
    %v52 = vld [vmem:[#allocation5 + $0x20] sm:$0xf]
    %v53 = vld [vmem:[#allocation5 + $0x24] sm:$0xf]
    %v54 = vld [vmem:[#allocation5 + $0x28] sm:$0xf]
    %v55 = vld [vmem:[#allocation5 + $0x2c] sm:$0xf]
    %v56 = vld [vmem:[#allocation5 + $0x30] sm:$0xf]
    %v57 = vld [vmem:[#allocation5 + $0x34] sm:$0xf]
    %v58 = vld [vmem:[#allocation5 + $0x38] sm:$0xf]
    %v59 = vld [vmem:[#allocation5 + $0x3c] sm:$0xf]
    %v60 = vmul.f32 %v42, %v42
    %v61 = vpack.c.bf16 %v60, %v60
    %v62 = vunpack.c.l.bf16 %v61
    %v63 = vsub.f32 %v60, %v62
    %v64 = vpack.c.bf16 %v63, %v63
    %v81 = vunpack.c.l.b16 %v44
    %v82 = vunpack.c.l.b16 %v45
    %v83 = vunpack.c.l.b16 %v46
    %v84 = vunpack.c.l.b16 %v47
    %v85 = vunpack.c.l.b16 %v48
    %v86 = vunpack.c.l.b16 %v49
    %v87 = vunpack.c.l.b16 %v50
    %v88 = vunpack.c.l.b16 %v51
    %v89 = vunpack.c.l.b16 %v52
    %v90 = vunpack.c.l.b16 %v53
    %v91 = vunpack.c.l.b16 %v54
    %v92 = vunpack.c.l.b16 %v55
    %v93 = vunpack.c.l.b16 %v56
    %v94 = vunpack.c.l.b16 %v57
    %v95 = vunpack.c.l.b16 %v58
    %v96 = vunpack.c.l.b16 %v59
    %v97 = vpack.c.b16 %v82, %v81
    %v98 = vpack.c.b16 %v84, %v83
    %v99 = vpack.c.b16 %v86, %v85
    %v100 = vpack.c.b16 %v88, %v87
    %v101 = vpack.c.b16 %v90, %v89
    %v102 = vpack.c.b16 %v92, %v91
    %v103 = vpack.c.b16 %v94, %v93
    %v104 = vpack.c.b16 %v96, %v95
    %113 = vmatprep.subr.bf16.mxu0 0
    %114 = vmatpush1.bf16.msra.mxu0 %v97
    %115 = vmatprep.subr.bf16.mxu0 0
    %116 = vmatpush1.bf16.msra.mxu0 %v98
    %117 = vmatprep.subr.bf16.mxu0 0
    %118 = vmatpush1.bf16.msra.mxu0 %v99
    %119 = vmatprep.subr.bf16.mxu0 0
    %120 = vmatpush1.bf16.msra.mxu0 %v100
    %121 = vmatprep.subr.bf16.mxu0 0
    %122 = vmatpush1.bf16.msra.mxu0 %v101
    %123 = vmatprep.subr.bf16.mxu0 0
    %124 = vmatpush1.bf16.msra.mxu0 %v102
    %125 = vmatprep.subr.bf16.mxu0 0
    %126 = vmatpush1.bf16.msra.mxu0 %v103
    %127 = vmatprep.subr.bf16.mxu0 0
    %128 = vmatpush1.bf16.msra.mxu0 %v104
    %129 = vmatprep.subr.bf16.mxu0 0
    %130 = vmatpush1.bf16.msra.mxu0 0
    %131 = vmatprep.subr.bf16.mxu0 0
    %132 = vmatpush1.bf16.msra.mxu0 0
    %133 = vmatprep.subr.bf16.mxu0 0
    %134 = vmatpush1.bf16.msra.mxu0 0
    %135 = vmatprep.subr.bf16.mxu0 0
    %136 = vmatpush1.bf16.msra.mxu0 0
    %137 = vmatprep.subr.bf16.mxu0 0
    %138 = vmatpush1.bf16.msra.mxu0 0
    %139 = vmatprep.subr.bf16.mxu0 0
    %140 = vmatpush1.bf16.msra.mxu0 0
    %141 = vmatprep.subr.bf16.mxu0 0
    %142 = vmatpush1.bf16.msra.mxu0 0
    %143 = vmatprep.subr.bf16.mxu0 0
    %144 = vmatpush1.bf16.msra.mxu0 0
    %145 = vmatprep.mubr.bf16.mxu0 0
    %146 = vmatmul.mubr.bf16.gmra.mrb[0].mxu0 %v64
    %v147 = vpop.f32.mrb[0].mxu0
    %v148 = vadd.f32 0.0, %v147
    %v149 = vpop.f32.mrb[0].mxu0
    %v150 = vpop.f32.mrb[0].mxu0
    %v151 = vpop.f32.mrb[0].mxu0
    %152 = vdwg.mxu0
    %153 = vmatprep.subr.bf16.mxu0 0
    %154 = vmatpush1.bf16.msra.mxu0 %v97
    %155 = vmatprep.subr.bf16.mxu0 0
    %156 = vmatpush1.bf16.msra.mxu0 %v98
    %157 = vmatprep.subr.bf16.mxu0 0
    %158 = vmatpush1.bf16.msra.mxu0 %v99
    %159 = vmatprep.subr.bf16.mxu0 0
    %160 = vmatpush1.bf16.msra.mxu0 %v100
    %161 = vmatprep.subr.bf16.mxu0 0
    %162 = vmatpush1.bf16.msra.mxu0 %v101
    %163 = vmatprep.subr.bf16.mxu0 0
    %164 = vmatpush1.bf16.msra.mxu0 %v102
    %165 = vmatprep.subr.bf16.mxu0 0
    %166 = vmatpush1.bf16.msra.mxu0 %v103
    %167 = vmatprep.subr.bf16.mxu0 0
    %168 = vmatpush1.bf16.msra.mxu0 %v104
    %169 = vmatprep.subr.bf16.mxu0 0
    %170 = vmatpush1.bf16.msra.mxu0 0
    %171 = vmatprep.subr.bf16.mxu0 0
    %172 = vmatpush1.bf16.msra.mxu0 0
    %173 = vmatprep.subr.bf16.mxu0 0
    %174 = vmatpush1.bf16.msra.mxu0 0
    %175 = vmatprep.subr.bf16.mxu0 0
    %176 = vmatpush1.bf16.msra.mxu0 0
    %177 = vmatprep.subr.bf16.mxu0 0
    %178 = vmatpush1.bf16.msra.mxu0 0
    %179 = vmatprep.subr.bf16.mxu0 0
    %180 = vmatpush1.bf16.msra.mxu0 0
    %181 = vmatprep.subr.bf16.mxu0 0
    %182 = vmatpush1.bf16.msra.mxu0 0
    %183 = vmatprep.subr.bf16.mxu0 0
    %184 = vmatpush1.bf16.msra.mxu0 0
    %185 = vmatprep.mubr.bf16.mxu0 0
    %186 = vmatmul.mubr.bf16.gmra.mrb[0].mxu0 %v61
    %v187 = vpop.f32.mrb[0].mxu0
    %v188 = vadd.f32 %v148, %v187
    %v189 = vpop.f32.mrb[0].mxu0
    %v190 = vpop.f32.mrb[0].mxu0
    %v191 = vpop.f32.mrb[0].mxu0
    %192 = vdwg.mxu0
    %v193 = vmul.f32 %v188, 0.03125
    %v194 = vadd.f32 %v193, 1e-08
    %v195 = vrsqrt.pop %v194
    %v196 = vmul.f32 %v42, %v195
    %v198 = vlaneseq
    %v199 = vshrl.u32 %v198, 7
    %v200 = vsub.s32 0, %v199
    %v201 = vrot.slane %v43, %v200
    %v203 = vmul.f32 %v196, %v201
    %204 = vst [vmem:[#allocation7] sm:$0xf] %v203
    // Predicated region
    $region22: #{tpu_custom_call.1} parent=1 // pred_check
      _
    $region23: #{tpu_custom_call.1} parent=1 // pred_check_branch
      %206 = sbr.rel (0) target = $region25
    $region24: #{tpu_custom_call.1} parent=1 // pred_region
      %s208 = ssub.s32 64, 64
      %209 = vsyncadd [#allocation4], %s208
      %s211 = sshll.u32 [#allocation7], 4
      %s212 = int_to_ptr.vmem [resolvable:$true] %s211
      %214 = dma.vmem_to_hbm [thread:$0]  %s212, 64, %s3, [#allocation4]
    $region25: #{tpu_custom_call.1} parent=1 // pred_fallthru
      _
    // Predicated region
    $region26: #{tpu_custom_call.1} parent=1 // pred_check
      _
    $region27: #{tpu_custom_call.1} parent=1 // pred_check_branch
      %216 = sbr.rel (0) target = $region29
    $region28: #{tpu_custom_call.1} parent=1 // pred_region
      %217 = dma.done [#allocation4], 64
    $region29: #{tpu_custom_call.1} parent=1 // pred_fallthru
      _
    %218 = vsyncpa [#allocation3], 1
    %219 = vsyncpa [#allocation6], 1
    %220 = vsyncpa [#allocation4], 1

</llo_original>
